<compile_context>
chip_gen: v7x
topology: tpu7x:2x2x1
jax: 0.10.0
libtpu: 0.0.40
codegen_flags: <defaults>
</compile_context>

<pallas_src>
import functools

import jax
import jax.numpy as jnp
from jax.experimental import pallas as pl
from jax.experimental.pallas import tpu as pltpu

_LANE = 128


def _pair(v):
    return tuple(v) if isinstance(v, (tuple, list)) else (v, v)


def _quadruple(v):
    return tuple(v) if isinstance(v, (tuple, list)) else (v, v, v, v)


def _cdiv(a, b):
    return -(-a // b)


# ----------------------------------------------------------------------------
# median math (elementwise min/max only -- VPU friendly, native dtype)
# ----------------------------------------------------------------------------
def _slice_win(x, axis, off, count, stride):
    idx = [slice(None)] * x.ndim
    idx[axis] = slice(off, off + (count - 1) * stride + 1, stride)
    return x[tuple(idx)]


def _sort3(a, b, c):
    lo01 = jnp.minimum(a, b)
    hi01 = jnp.maximum(a, b)
    lo = jnp.minimum(lo01, c)
    mx = jnp.maximum(lo01, c)
    mid = jnp.minimum(hi01, mx)
    hi = jnp.maximum(hi01, mx)
    return lo, mid, hi


def _med3(a, b, c):
    return jnp.maximum(jnp.minimum(a, b), jnp.minimum(jnp.maximum(a, b), c))


def _median_generic(vals):
    """Partial selection 'sort': lower median sorted[(m-1)//2] (torch.median)."""
    v = list(vals)
    m = len(v)
    med = (m - 1) // 2
    for i in range(med + 1):
        for j in range(i + 1, m):
            a, b = v[i], v[j]
            v[i] = jnp.minimum(a, b)
            if i < med:                      # max never read again on the last pass
                v[j] = jnp.maximum(a, b)
    return v[med]


def _median_filter(x, h_axis, w_axis, kh, kw, sh, sw, nh, nw):
    """Median filter of an in-VMEM block. Window shifts stay off the lane axis
    in the lane-layout path; in the native-layout path the (cheap) horizontal
    shifts land on the lane axis / XLU which has slack in this VALU-bound kernel.
    """
    if kh == 3 and kw == 3:
        # Shared column-sort 3x3 median: ~18 min/max per output.
        r0 = _slice_win(x, h_axis, 0, nh, sh)
        r1 = _slice_win(x, h_axis, 1, nh, sh)
        r2 = _slice_win(x, h_axis, 2, nh, sh)
        lo, mid, hi = _sort3(r0, r1, r2)                 # shared across kw shifts
        lo0, lo1, lo2 = (_slice_win(lo, w_axis, d, nw, sw) for d in range(3))
        mi0, mi1, mi2 = (_slice_win(mid, w_axis, d, nw, sw) for d in range(3))
        hi0, hi1, hi2 = (_slice_win(hi, w_axis, d, nw, sw) for d in range(3))
        mx_lo = jnp.maximum(jnp.maximum(lo0, lo1), lo2)
        md_mi = _med3(mi0, mi1, mi2)
        mn_hi = jnp.minimum(jnp.minimum(hi0, hi1), hi2)
        return _med3(mx_lo, md_mi, mn_hi)
    vals = []
    for dk in range(kh):
        row = _slice_win(x, h_axis, dk, nh, sh)
        for dj in range(kw):
            vals.append(_slice_win(row, w_axis, dj, nw, sw))
    return _median_generic(vals)


# ----------------------------------------------------------------------------
# kernels
# ----------------------------------------------------------------------------
def _batch_median_kernel(x_ref, o_ref, *, kh, kw, sh, sw, nh, nw):
    # x_ref: (bt, Hp, Wp) native layout (W on lanes); o_ref: (bt, Ho, Wo)
    med = _median_filter(x_ref[...], 1, 2, kh, kw, sh, sw, nh, nw)
    o_ref[...] = med.astype(o_ref.dtype)


def _lane_median_kernel(x_ref, o_ref, *, kh, kw, sh, sw, nh, nw):
    # x_ref: (rows, Wp, LB) channels-on-lanes; o_ref: (nh, Wo, LB)
    med = _median_filter(x_ref[...], 0, 1, kh, kw, sh, sw, nh, nw)
    o_ref[...] = med.astype(o_ref.dtype)


def _lane_median_halo_kernel(a_ref, b_ref, o_ref, *, kh, kw, sh, sw, nh, nw):
    # a_ref: (th*sh, Wp, LB) main rows, b_ref: (halo, Wp, LB) halo rows fetched
    # from the same HBM array by a second Blocked BlockSpec (no wrapper gather).
    x = jnp.concatenate([a_ref[...], b_ref[...]], axis=0)
    med = _median_filter(x, 0, 1, kh, kw, sh, sw, nh, nw)
    o_ref[...] = med.astype(o_ref.dtype)


# ----------------------------------------------------------------------------
# tiling helpers
# ----------------------------------------------------------------------------
def _vmem_budget():
    try:
        cap = int(pltpu.get_tpu_info().vmem_capacity_bytes)
    except Exception:
        cap = 64 * 1024 * 1024               # conservative: v7x physical VMEM
    limit = min(int(cap * 0.75), 96 * 1024 * 1024)
    return limit, int(limit * 0.8)


def _num_tensorcores():
    try:
        info = pltpu.get_tpu_info()
    except Exception:
        return 1
    for attr in ("num_tensorcores", "tensorcores_per_chip", "num_cores",
                 "cores_per_chip"):
        v = getattr(info, attr, None)
        if isinstance(v, int) and v >= 1:
            return v
    return 1


def _pick_tile_rows(ho, th_max, sh, halo):
    """Largest th <= th_max with halo | th*sh (so the halo block lands on a block
    boundary), preferring th | ho so the last tile needs no edge padding."""
    th_max = max(1, min(th_max, ho))
    if th_max >= ho:
        return ho
    best_div = 0
    best_any = 0
    for t in range(th_max, 0, -1):
        if halo > 0 and (t * sh) % halo != 0:
            continue
        if best_any == 0:
            best_any = t
        if ho % t == 0:
            best_div = t
            break
    if best_div and best_div * 2 >= best_any:
        return best_div
    if best_any:
        return best_any
    return min(max(halo, 1), ho)


# ----------------------------------------------------------------------------
# public entry point
# ----------------------------------------------------------------------------
def median_pool2d(x, kernel_size=3, stride=1, padding=0, same=False,
                  _force_rows_per_tile=None):
    """Matches MedianPool2d.forward semantics. x: (N, C, H, W)."""
    kh, kw = _pair(kernel_size)
    sh, sw = _pair(stride)
    n, c, ih, iw = x.shape

    # Padding (same as MedianPool2d._padding): (left, right, top, bottom)
    if same:
        ph = max(kh - sh, 0) if ih % sh == 0 else max(kh - ih % sh, 0)
        pw = max(kw - sw, 0) if iw % sw == 0 else max(kw - iw % sw, 0)
        p_l = pw // 2
        p_r = pw - p_l
        p_t = ph // 2
        p_b = ph - p_t
    else:
        p_l, p_r, p_t, p_b = _quadruple(padding)

    if p_l or p_r or p_t or p_b:
        xp = jnp.pad(x, ((0, 0), (0, 0), (p_t, p_b), (p_l, p_r)), mode="reflect")
    else:
        xp = x                                    # default zero-padding: no HBM pass

    hp, wp = xp.shape[2], xp.shape[3]
    ho = (hp - kh) // sh + 1
    wo = (wp - kw) // sw + 1
    b = n * c
    # Invariant: every valid output row/col only reads original (un-padded) data.
    assert hp >= (ho - 1) * sh + kh and wp >= (wo - 1) * sw + kw

    xb = xp.reshape(b, hp, wp)                    # free reshape, native layout
    itemsize = jnp.dtype(x.dtype).itemsize
    vmem_limit, budget = _vmem_budget()
    cores = _num_tensorcores()
    is_3x3 = (kh == 3 and kw == 3)
    n_tmp = 6 if is_3x3 else (kh * kw + 2)        # output-sized live temporaries
    col_tmp = 3 if is_3x3 else 1                  # full-width lo/mid/hi temporaries

    # ---- Path 1: small N*C -> native (N*C, Hp, Wp) layout, W on lanes --------
    # Avoids the channels-on-lanes transposes and the 128/b lane-padding blow-up.
    if b < _LANE and sh == 1 and sw == 1 and _force_rows_per_tile is None:
        def fp_batch(bt):
            return itemsize * bt * (3 * hp * wp + col_tmp * ho * wp + n_tmp * ho * wo)

        bt = b
        while bt > 1 and fp_batch(bt) > budget:
            bt = _cdiv(bt, 2)
        if fp_batch(bt) <= budget:
            if cores >= 2 and b >= 2 and _cdiv(b, bt) == 1:
                bt = _cdiv(b, 2)                  # give the 2nd TensorCore work
            nb = _cdiv(b, bt)
            kernel = functools.partial(_batch_median_kernel, kh=kh, kw=kw,
                                       sh=sh, sw=sw, nh=ho, nw=wo)
            out = pl.pallas_call(
                kernel,
                grid=(nb,),
                in_specs=[pl.BlockSpec((bt, hp, wp), lambda i: (i, 0, 0))],
                out_specs=pl.BlockSpec((bt, ho, wo), lambda i: (i, 0, 0)),
                out_shape=jax.ShapeDtypeStruct((b, ho, wo), x.dtype),
                compiler_params=pltpu.CompilerParams(
                    dimension_semantics=("parallel",),
                    vmem_limit_bytes=vmem_limit),
            )(xb)
            return out.reshape(n, c, ho, wo)
        # TODO(synk): add H tiling to the native-layout path so huge images with
        # tiny channel counts do not fall back to the lane-padded path below.

    # ---- Path 2: channels-on-lanes (Hp, Wp, N*C), lane-dense stores ----------
    xl = jnp.transpose(xb, (1, 2, 0))             # (Hp, Wp, B)
    b_pad = _cdiv(b, _LANE) * _LANE
    if b_pad != b:
        # TODO(synk): fold this pad/transpose into the kernel (allow_input_fusion)
        xl = jnp.pad(xl, ((0, 0), (0, 0), (0, b_pad - b)))

    halo = max(kh - sh, 0)
    th_in_full = (ho - 1) * sh + kh

    def fp_lane(th, lb):
        th_in = (th - 1) * sh + kh
        return itemsize * lb * (3 * th_in * wp + col_tmp * th * wp + n_tmp * th * wo)

    # Prefer shrinking the lane block (no halo duplication) before tiling H.
    lb = b_pad
    while fp_lane(ho, lb) > budget and lb % (2 * _LANE) == 0:
        lb //= 2

    th = ho
    if _force_rows_per_tile is not None:
        th = max(1, min(int(_force_rows_per_tile), ho))
    elif fp_lane(ho, lb) > budget:
        while th > 1 and fp_lane(th, lb) > budget:
            th = _cdiv(th, 2)
    if th < ho:
        th = _pick_tile_rows(ho, th, sh, halo)

    nt = _cdiv(ho, th)
    nl = b_pad // lb
    # Only split lanes to feed a 2nd TensorCore (never force an H split).
    if nt == 1 and nl == 1 and cores >= 2 and b_pad % (2 * _LANE) == 0:
        lb //= 2
        nl = 2

    kern_kwargs = dict(kh=kh, kw=kw, sh=sh, sw=sw, nh=th, nw=wo)

    if nt == 1:
        kernel = functools.partial(_lane_median_kernel, **kern_kwargs)
        out = pl.pallas_call(
            kernel,
            grid=(nl,),
            in_specs=[pl.BlockSpec((th_in_full, wp, lb), lambda l: (0, 0, l))],
            out_specs=pl.BlockSpec((ho, wo, lb), lambda l: (0, 0, l)),
            out_shape=jax.ShapeDtypeStruct((ho, wo, b_pad), x.dtype),
            compiler_params=pltpu.CompilerParams(
                dimension_semantics=("parallel",),
                vmem_limit_bytes=vmem_limit),
        )(xl)
    else:
        rows_a = th * sh
        ho_pad = nt * th
        if halo > 0 and ho_pad * sh + halo > hp:
            # Rare fallback (no tile height divides ho): the appended edge rows
            # only ever feed output rows >= ho, which are sliced off below.
            xl = jnp.pad(xl, ((0, ho_pad * sh + halo - hp), (0, 0), (0, 0)),
                         mode="edge")
        if halo > 0:
            assert rows_a % halo == 0            # guaranteed by _pick_tile_rows
            bstep = rows_a // halo               # halo-block index step per tile
            kernel = functools.partial(_lane_median_halo_kernel, **kern_kwargs)
            in_specs = [
                pl.BlockSpec((rows_a, wp, lb), lambda t, l: (t, 0, l)),
                pl.BlockSpec((halo, wp, lb), lambda t, l: ((t + 1) * bstep, 0, l)),
            ]
            operands = (xl, xl)
        else:                                     # kh <= sh: windows never overlap
            kernel = functools.partial(_lane_median_kernel, **kern_kwargs)
            in_specs = [pl.BlockSpec((rows_a, wp, lb), lambda t, l: (t, 0, l))]
            operands = (xl,)
        out = pl.pallas_call(
            kernel,
            grid=(nt, nl),
            in_specs=in_specs,
            out_specs=pl.BlockSpec((th, wo, lb), lambda t, l: (t, 0, l)),
            out_shape=jax.ShapeDtypeStruct((ho_pad, wo, b_pad), x.dtype),
            compiler_params=pltpu.CompilerParams(
                dimension_semantics=("parallel", "parallel"),
                vmem_limit_bytes=vmem_limit),
        )(*operands)
        if ho_pad != ho:
            out = out[:ho]

    if b_pad != b:
        out = out[:, :, :b]
    return jnp.transpose(out, (2, 0, 1)).reshape(n, c, ho, wo)


# ----------------------------------------------------------------------------
# plain-JAX reference (mirrors the PyTorch unfold + median path)
# ----------------------------------------------------------------------------
def _median_pool2d_reference(x, kernel_size=3, stride=1, padding=0, same=False):
    kh, kw = _pair(kernel_size)
    sh, sw = _pair(stride)
    n, c, ih, iw = x.shape
    if same:
        ph = max(kh - sh, 0) if ih % sh == 0 else max(kh - ih % sh, 0)
        pw = max(kw - sw, 0) if iw % sw == 0 else max(kw - iw % sw, 0)
        p_l = pw // 2
        p_r = pw - p_l
        p_t = ph // 2
        p_b = ph - p_t
    else:
        p_l, p_r, p_t, p_b = _quadruple(padding)
    xp = jnp.pad(x, ((0, 0), (0, 0), (p_t, p_b), (p_l, p_r)), mode="reflect")
    hp, wp = xp.shape[2], xp.shape[3]
    ho = (hp - kh) // sh + 1
    wo = (wp - kw) // sw + 1
    patches = []
    for di in range(kh):
        for dj in range(kw):
            patches.append(
                xp[:, :, di:di + (ho - 1) * sh + 1:sh, dj:dj + (wo - 1) * sw + 1:sw]
            )
    stacked = jnp.stack(patches, axis=-1)
    s = jnp.sort(stacked, axis=-1)
    return s[..., (kh * kw - 1) // 2]


if __name__ == "__main__":
    key = jax.random.PRNGKey(0)
    k1, k2, k3, k4 = jax.random.split(key, 4)

    # 1) Default MedianPool2d() on a small-channel input -> native-layout path.
    x1 = jax.random.normal(k1, (2, 4, 16, 16), dtype=jnp.float32)
    out1 = jax.block_until_ready(median_pool2d(x1))
    ref1 = _median_pool2d_reference(x1)
    assert out1.shape == (2, 4, 14, 14), out1.shape
    assert jnp.allclose(out1, ref1, atol=1e-6, rtol=1e-6), "mismatch (default)"

    # 2) same=True (exercises reflect padding).
    out2 = jax.block_until_ready(median_pool2d(x1, same=True))
    ref2 = _median_pool2d_reference(x1, same=True)
    assert out2.shape == (2, 4, 16, 16), out2.shape
    assert jnp.allclose(out2, ref2, atol=1e-6, rtol=1e-6), "mismatch (same)"

    # 3) N*C >= 128 -> channels-on-lanes path (lane-dense stores), single H tile.
    x3 = jax.random.normal(k2, (2, 64, 16, 16), dtype=jnp.float32)
    out3 = jax.block_until_ready(median_pool2d(x3))
    ref3 = _median_pool2d_reference(x3)
    assert out3.shape == (2, 64, 14, 14), out3.shape
    assert jnp.allclose(out3, ref3, atol=1e-6, rtol=1e-6), "mismatch (lane path)"

    # 4) Forced H tiling -> overlapping windows delivered by main + halo
    #    BlockSpecs (no wrapper-side gather).
    x4 = jax.random.normal(k3, (1, 128, 38, 16), dtype=jnp.float32)
    out4 = jax.block_until_ready(median_pool2d(x4, _force_rows_per_tile=12))
    ref4 = _median_pool2d_reference(x4)
    assert out4.shape == (1, 128, 36, 14), out4.shape
    assert jnp.allclose(out4, ref4, atol=1e-6, rtol=1e-6), "mismatch (halo tiles)"

    # 5) bf16 input (median selects existing values -> exact match).
    x5 = jax.random.normal(k4, (1, 3, 16, 16), dtype=jnp.bfloat16)
    out5 = jax.block_until_ready(median_pool2d(x5))
    ref5 = _median_pool2d_reference(x5)
    assert out5.shape == (1, 3, 14, 14), out5.shape
    assert jnp.array_equal(out5, ref5), "mismatch (bf16)"

    print("KERNEL_OK")
</pallas_src>

<mosaic_0001>
module attributes {stable_mosaic.version = 11 : i64} {
  func.func @_batch_median_kernel(%arg0: i32, %arg1: memref<8x16x16xf32, #tpu.memory_space<vmem>>, %arg2: memref<8x14x14xf32, #tpu.memory_space<vmem>>) attributes {dimension_semantics = [#tpu.dimension_semantics<parallel>], iteration_bounds = array<i64: 1>, scalar_prefetch = 0 : i64, scratch_operands = 0 : i64, tpu.core_type = #tpu.core_type<tc>, window_params = [{transform_indices = @transform_0, window_bounds = array<i64: 8, 16, 16>}, {transform_indices = @transform_1, window_bounds = array<i64: 8, 14, 14>}]} {
    %c0 = arith.constant 0 : index
    %c0_0 = arith.constant 0 : index
    %c0_1 = arith.constant 0 : index
    %0 = vector.load %arg1[%c0, %c0_0, %c0_1] : memref<8x16x16xf32, #tpu.memory_space<vmem>>, vector<8x16x16xf32>
    %1 = vector.extract_strided_slice %0 {offsets = [0, 0, 0], sizes = [8, 14, 16], strides = [1, 1, 1]} : vector<8x16x16xf32> to vector<8x14x16xf32>
    %2 = vector.extract_strided_slice %0 {offsets = [0, 1, 0], sizes = [8, 14, 16], strides = [1, 1, 1]} : vector<8x16x16xf32> to vector<8x14x16xf32>
    %3 = vector.extract_strided_slice %0 {offsets = [0, 2, 0], sizes = [8, 14, 16], strides = [1, 1, 1]} : vector<8x16x16xf32> to vector<8x14x16xf32>
    %4 = arith.minimumf %1, %2 : vector<8x14x16xf32>
    %5 = arith.maximumf %1, %2 : vector<8x14x16xf32>
    %6 = arith.minimumf %4, %3 : vector<8x14x16xf32>
    %7 = arith.maximumf %4, %3 : vector<8x14x16xf32>
    %8 = arith.minimumf %5, %7 : vector<8x14x16xf32>
    %9 = arith.maximumf %5, %7 : vector<8x14x16xf32>
    %10 = vector.extract_strided_slice %6 {offsets = [0, 0, 0], sizes = [8, 14, 14], strides = [1, 1, 1]} : vector<8x14x16xf32> to vector<8x14x14xf32>
    %11 = vector.extract_strided_slice %6 {offsets = [0, 0, 1], sizes = [8, 14, 14], strides = [1, 1, 1]} : vector<8x14x16xf32> to vector<8x14x14xf32>
    %12 = vector.extract_strided_slice %6 {offsets = [0, 0, 2], sizes = [8, 14, 14], strides = [1, 1, 1]} : vector<8x14x16xf32> to vector<8x14x14xf32>
    %13 = vector.extract_strided_slice %8 {offsets = [0, 0, 0], sizes = [8, 14, 14], strides = [1, 1, 1]} : vector<8x14x16xf32> to vector<8x14x14xf32>
    %14 = vector.extract_strided_slice %8 {offsets = [0, 0, 1], sizes = [8, 14, 14], strides = [1, 1, 1]} : vector<8x14x16xf32> to vector<8x14x14xf32>
    %15 = vector.extract_strided_slice %8 {offsets = [0, 0, 2], sizes = [8, 14, 14], strides = [1, 1, 1]} : vector<8x14x16xf32> to vector<8x14x14xf32>
    %16 = vector.extract_strided_slice %9 {offsets = [0, 0, 0], sizes = [8, 14, 14], strides = [1, 1, 1]} : vector<8x14x16xf32> to vector<8x14x14xf32>
    %17 = vector.extract_strided_slice %9 {offsets = [0, 0, 1], sizes = [8, 14, 14], strides = [1, 1, 1]} : vector<8x14x16xf32> to vector<8x14x14xf32>
    %18 = vector.extract_strided_slice %9 {offsets = [0, 0, 2], sizes = [8, 14, 14], strides = [1, 1, 1]} : vector<8x14x16xf32> to vector<8x14x14xf32>
    %19 = arith.maximumf %10, %11 : vector<8x14x14xf32>
    %20 = arith.maximumf %19, %12 : vector<8x14x14xf32>
    %21 = arith.minimumf %13, %14 : vector<8x14x14xf32>
    %22 = arith.maximumf %13, %14 : vector<8x14x14xf32>
    %23 = arith.minimumf %22, %15 : vector<8x14x14xf32>
    %24 = arith.maximumf %21, %23 : vector<8x14x14xf32>
    %25 = arith.minimumf %16, %17 : vector<8x14x14xf32>
    %26 = arith.minimumf %25, %18 : vector<8x14x14xf32>
    %27 = arith.minimumf %20, %24 : vector<8x14x14xf32>
    %28 = arith.maximumf %20, %24 : vector<8x14x14xf32>
    %29 = arith.minimumf %28, %26 : vector<8x14x14xf32>
    %30 = arith.maximumf %27, %29 : vector<8x14x14xf32>
    %c0_2 = arith.constant 0 : index
    %c0_3 = arith.constant 0 : index
    %c0_4 = arith.constant 0 : index
    %31 = vector.load %arg2[%c0_2, %c0_3, %c0_4] : memref<8x14x14xf32, #tpu.memory_space<vmem>>, vector<8x14x14xf32>
    tpu.vector_store %arg2[%c0_2, %c0_3, %c0_4], %30 {strides = array<i32>} : memref<8x14x14xf32, #tpu.memory_space<vmem>>, vector<8x14x14xf32>,
    return
  }
  func.func @transform_0(%arg0: i32) -> (i32, i32, i32) {
    %c0_i32 = arith.constant 0 : i32
    %c0_i32_0 = arith.constant 0 : i32
    %c0_i32_1 = arith.constant 0 : i32
    return %arg0, %c0_i32, %c0_i32_0 : i32, i32, i32
  }
  func.func @transform_1(%arg0: i32) -> (i32, i32, i32) {
    %c0_i32 = arith.constant 0 : i32
    %c0_i32_0 = arith.constant 0 : i32
    %c0_i32_1 = arith.constant 0 : i32
    return %arg0, %c0_i32, %c0_i32_0 : i32, i32, i32
  }
}

</mosaic_0001>

<llo_original>
// kernel: tpu_custom_call.1
$region0: #{tpu_custom_call.1}
  #allocation0 [shape = 'u32[]', space=smem, size = 0x4, offset = 0x4, fixed_abs, tag = 'smem constant byte address 0x4 - core index']
  #allocation1 [shape = 'u32[144,128]{1,0:T(1,128)}', space=vmem, size = 0x12000, scoped, tag = 'internal scratch']
  %s0 = inlined_call_operand.hbm [shape: f32[8,16,16], index: 0, kind: input, shape index: {}]
  %s1 = inlined_call_operand.vmem [shape: f32[8,14,14], index: 1, kind: output, shape index: {}]
  %s2 = sld [smem:[#allocation0]]
  $region18: #{tpu_custom_call.1} parent=0
    _
  %s4 = ssub.s32 1, %s2
  %s5 = scalar_select 0, %s4, %s2
  $region1: #{tpu_custom_call.1} parent=0
    #allocation2 [shape = 'u8[65536]{0}', space=vmem, size = 0x10000, scoped, tag = 'input window, operand 0, single buffered']
    #allocation3 [shape = 's32[1]{0}', space=sflag, size = 0x4, scoped, tag = 'scoped memory for tpu_custom_call.1']
    %6 = vsyncpa [#allocation3], 0
    // Predicated region
    $region2: #{tpu_custom_call.1} parent=1 // pred_check
      _
    $region3: #{tpu_custom_call.1} parent=1 // pred_check_branch
      %8 = sbr.rel (0) target = $region5
    $region4: #{tpu_custom_call.1} parent=1 // pred_region
      %s10 = ssub.s32 2048, 2048
      %11 = vsyncadd [#allocation3], %s10
      %s12 = sshll.u32 [#allocation2], 4
      %s13 = int_to_ptr.vmem [resolvable:$true] %s12
      %18 = dma.hbm_to_vmem [thread:$0]  %s0, 2048, %s13, [#allocation3], 128, 128, 8
    $region5: #{tpu_custom_call.1} parent=1 // pred_fallthru
      _
    // Predicated region
    $region6: #{tpu_custom_call.1} parent=1 // pred_check
      _
    $region7: #{tpu_custom_call.1} parent=1 // pred_check_branch
      %20 = sbr.rel (0) target = $region9
    $region8: #{tpu_custom_call.1} parent=1 // pred_region
      %21 = dma.done [#allocation3], 2048
    $region9: #{tpu_custom_call.1} parent=1 // pred_fallthru
      _
    %v22 = vld [vmem:[#allocation2] sm:$0xff]
    %v23 = vld [vmem:[#allocation2 + $0x8] sm:$0xff]
    %v24 = vld [vmem:[#allocation2 + $0x10] sm:$0xff]
    %v25 = vld [vmem:[#allocation2 + $0x18] sm:$0xff]
    %v26 = vld [vmem:[#allocation2 + $0x20] sm:$0xff]
    %v27 = vld [vmem:[#allocation2 + $0x28] sm:$0xff]
    %v28 = vld [vmem:[#allocation2 + $0x30] sm:$0xff]
    %v29 = vld [vmem:[#allocation2 + $0x38] sm:$0xff]
    %v30 = vld [vmem:[#allocation2 + $0x40] sm:$0xff]
    %v31 = vld [vmem:[#allocation2 + $0x48] sm:$0xff]
    %v32 = vld [vmem:[#allocation2 + $0x50] sm:$0xff]
    %v33 = vld [vmem:[#allocation2 + $0x58] sm:$0xff]
    %v34 = vld [vmem:[#allocation2 + $0x60] sm:$0xff]
    %v35 = vld [vmem:[#allocation2 + $0x68] sm:$0xff]
    %v36 = vld [vmem:[#allocation2 + $0x70] sm:$0xff]
    %v37 = vld [vmem:[#allocation2 + $0x78] sm:$0xff]
    %vm54 = vcmask 1046528
    %v55 = vrot.slane %v22, 1
    %v56 = vrot.slane %v23, 1
    %v57 = vsel %vm54, %v55, %v56
    %v58 = vrot.slane %v24, 1
    %v59 = vrot.slane %v25, 1
    %v60 = vsel %vm54, %v58, %v59
    %v61 = vrot.slane %v26, 1
    %v62 = vrot.slane %v27, 1
    %v63 = vsel %vm54, %v61, %v62
    %v64 = vrot.slane %v28, 1
    %v65 = vrot.slane %v29, 1
    %v66 = vsel %vm54, %v64, %v65
    %v67 = vrot.slane %v30, 1
    %v68 = vrot.slane %v31, 1
    %v69 = vsel %vm54, %v67, %v68
    %v70 = vrot.slane %v32, 1
    %v71 = vrot.slane %v33, 1
    %v72 = vsel %vm54, %v70, %v71
    %v73 = vrot.slane %v34, 1
    %v74 = vrot.slane %v35, 1
    %v75 = vsel %vm54, %v73, %v74
    %v76 = vrot.slane %v36, 1
    %v77 = vrot.slane %v37, 1
    %v78 = vsel %vm54, %v76, %v77
    %v95 = vmin.f32 %v22, %v57
    %v96 = vmin.f32 %v23, %v56
    %v97 = vmin.f32 %v24, %v60
    %v98 = vmin.f32 %v25, %v59
    %v99 = vmin.f32 %v26, %v63
    %v100 = vmin.f32 %v27, %v62
    %v101 = vmin.f32 %v28, %v66
    %v102 = vmin.f32 %v29, %v65
    %v103 = vmin.f32 %v30, %v69
    %v104 = vmin.f32 %v31, %v68
    %v105 = vmin.f32 %v32, %v72
    %v106 = vmin.f32 %v33, %v71
    %v107 = vmin.f32 %v34, %v75
    %v108 = vmin.f32 %v35, %v74
    %v109 = vmin.f32 %v36, %v78
    %v110 = vmin.f32 %v37, %v77
    %v111 = vmax.f32 %v22, %v57
    %v112 = vmax.f32 %v23, %v56
    %v113 = vmax.f32 %v24, %v60
    %v114 = vmax.f32 %v25, %v59
    %v115 = vmax.f32 %v26, %v63
    %v116 = vmax.f32 %v27, %v62
    %v117 = vmax.f32 %v28, %v66
    %v118 = vmax.f32 %v29, %v65
    %v119 = vmax.f32 %v30, %v69
    %v120 = vmax.f32 %v31, %v68
    %v121 = vmax.f32 %v32, %v72
    %v122 = vmax.f32 %v33, %v71
    %v123 = vmax.f32 %v34, %v75
    %v124 = vmax.f32 %v35, %v74
    %v125 = vmax.f32 %v36, %v78
    %v126 = vmax.f32 %v37, %v77
    %vm127 = vcmask 1045504
    %v128 = vrot.slane %v22, 2
    %v129 = vrot.slane %v23, 2
    %v130 = vsel %vm127, %v128, %v129
    %v131 = vrot.slane %v24, 2
    %v132 = vrot.slane %v25, 2
    %v133 = vsel %vm127, %v131, %v132
    %v134 = vrot.slane %v26, 2
    %v135 = vrot.slane %v27, 2
    %v136 = vsel %vm127, %v134, %v135
    %v137 = vrot.slane %v28, 2
    %v138 = vrot.slane %v29, 2
    %v139 = vsel %vm127, %v137, %v138
    %v140 = vrot.slane %v30, 2
    %v141 = vrot.slane %v31, 2
    %v142 = vsel %vm127, %v140, %v141
    %v143 = vrot.slane %v32, 2
    %v144 = vrot.slane %v33, 2
    %v145 = vsel %vm127, %v143, %v144
    %v146 = vrot.slane %v34, 2
    %v147 = vrot.slane %v35, 2
    %v148 = vsel %vm127, %v146, %v147
    %v149 = vrot.slane %v36, 2
    %v150 = vrot.slane %v37, 2
    %v151 = vsel %vm127, %v149, %v150
    %v168 = vmin.f32 %v95, %v130
    %v169 = vmin.f32 %v96, %v129
    %v170 = vmin.f32 %v97, %v133
    %v171 = vmin.f32 %v98, %v132
    %v172 = vmin.f32 %v99, %v136
    %v173 = vmin.f32 %v100, %v135
    %v174 = vmin.f32 %v101, %v139
    %v175 = vmin.f32 %v102, %v138
    %v176 = vmin.f32 %v103, %v142
    %v177 = vmin.f32 %v104, %v141
    %v178 = vmin.f32 %v105, %v145
    %v179 = vmin.f32 %v106, %v144
    %v180 = vmin.f32 %v107, %v148
    %v181 = vmin.f32 %v108, %v147
    %v182 = vmin.f32 %v109, %v151
    %v183 = vmin.f32 %v110, %v150
    %v184 = vmax.f32 %v95, %v130
    %v185 = vmax.f32 %v96, %v129
    %v186 = vmax.f32 %v97, %v133
    %v187 = vmax.f32 %v98, %v132
    %v188 = vmax.f32 %v99, %v136
    %v189 = vmax.f32 %v100, %v135
    %v190 = vmax.f32 %v101, %v139
    %v191 = vmax.f32 %v102, %v138
    %v192 = vmax.f32 %v103, %v142
    %v193 = vmax.f32 %v104, %v141
    %v194 = vmax.f32 %v105, %v145
    %v195 = vmax.f32 %v106, %v144
    %v196 = vmax.f32 %v107, %v148
    %v197 = vmax.f32 %v108, %v147
    %v198 = vmax.f32 %v109, %v151
    %v199 = vmax.f32 %v110, %v150
    %v200 = vmin.f32 %v111, %v184
    %v201 = vmin.f32 %v112, %v185
    %v202 = vmin.f32 %v113, %v186
    %v203 = vmin.f32 %v114, %v187
    %v204 = vmin.f32 %v115, %v188
    %v205 = vmin.f32 %v116, %v189
    %v206 = vmin.f32 %v117, %v190
    %v207 = vmin.f32 %v118, %v191
    %v208 = vmin.f32 %v119, %v192
    %v209 = vmin.f32 %v120, %v193
    %v210 = vmin.f32 %v121, %v194
    %v211 = vmin.f32 %v122, %v195
    %v212 = vmin.f32 %v123, %v196
    %v213 = vmin.f32 %v124, %v197
    %v214 = vmin.f32 %v125, %v198
    %v215 = vmin.f32 %v126, %v199
    %v216 = vmax.f32 %v111, %v184
    %v217 = vmax.f32 %v112, %v185
    %v218 = vmax.f32 %v113, %v186
    %v219 = vmax.f32 %v114, %v187
    %v220 = vmax.f32 %v115, %v188
    %v221 = vmax.f32 %v116, %v189
    %v222 = vmax.f32 %v117, %v190
    %v223 = vmax.f32 %v118, %v191
    %v224 = vmax.f32 %v119, %v192
    %v225 = vmax.f32 %v120, %v193
    %v226 = vmax.f32 %v121, %v194
    %v227 = vmax.f32 %v122, %v195
    %v228 = vmax.f32 %v123, %v196
    %v229 = vmax.f32 %v124, %v197
    %v230 = vmax.f32 %v125, %v198
    %v231 = vmax.f32 %v126, %v199
    %248 = vrot.lane.b32.xlu0 %v168, 127
    %v249 = vpop.permute.xlu0 %248
    %250 = vrot.lane.b32.xlu0 %v169, 127
    %v251 = vpop.permute.xlu0 %250
    %252 = vrot.lane.b32.xlu0 %v170, 127
    %v253 = vpop.permute.xlu0 %252
    %254 = vrot.lane.b32.xlu0 %v171, 127
    %v255 = vpop.permute.xlu0 %254
    %256 = vrot.lane.b32.xlu0 %v172, 127
    %v257 = vpop.permute.xlu0 %256
    %258 = vrot.lane.b32.xlu0 %v173, 127
    %v259 = vpop.permute.xlu0 %258
    %260 = vrot.lane.b32.xlu0 %v174, 127
    %v261 = vpop.permute.xlu0 %260
    %262 = vrot.lane.b32.xlu0 %v175, 127
    %v263 = vpop.permute.xlu0 %262
    %264 = vrot.lane.b32.xlu0 %v176, 127
    %v265 = vpop.permute.xlu0 %264
    %266 = vrot.lane.b32.xlu0 %v177, 127
    %v267 = vpop.permute.xlu0 %266
    %268 = vrot.lane.b32.xlu0 %v178, 127
    %v269 = vpop.permute.xlu0 %268
    %270 = vrot.lane.b32.xlu0 %v179, 127
    %v271 = vpop.permute.xlu0 %270
    %272 = vrot.lane.b32.xlu0 %v180, 127
    %v273 = vpop.permute.xlu0 %272
    %274 = vrot.lane.b32.xlu0 %v181, 127
    %v275 = vpop.permute.xlu0 %274
    %276 = vrot.lane.b32.xlu0 %v182, 127
    %v277 = vpop.permute.xlu0 %276
    %278 = vrot.lane.b32.xlu0 %v183, 127
    %v279 = vpop.permute.xlu0 %278
    %v296 = vmax.f32 %v168, %v249
    %v297 = vmax.f32 %v169, %v251
    %v298 = vmax.f32 %v170, %v253
    %v299 = vmax.f32 %v171, %v255
    %v300 = vmax.f32 %v172, %v257
    %v301 = vmax.f32 %v173, %v259
    %v302 = vmax.f32 %v174, %v261
    %v303 = vmax.f32 %v175, %v263
    %v304 = vmax.f32 %v176, %v265
    %v305 = vmax.f32 %v177, %v267
    %v306 = vmax.f32 %v178, %v269
    %v307 = vmax.f32 %v179, %v271
    %v308 = vmax.f32 %v180, %v273
    %v309 = vmax.f32 %v181, %v275
    %v310 = vmax.f32 %v182, %v277
    %v311 = vmax.f32 %v183, %v279
    %312 = vrot.lane.b32.xlu0 %v168, 126
    %v313 = vpop.permute.xlu0 %312
    %314 = vrot.lane.b32.xlu0 %v169, 126
    %v315 = vpop.permute.xlu0 %314
    %316 = vrot.lane.b32.xlu0 %v170, 126
    %v317 = vpop.permute.xlu0 %316
    %318 = vrot.lane.b32.xlu0 %v171, 126
    %v319 = vpop.permute.xlu0 %318
    %320 = vrot.lane.b32.xlu0 %v172, 126
    %v321 = vpop.permute.xlu0 %320
    %322 = vrot.lane.b32.xlu0 %v173, 126
    %v323 = vpop.permute.xlu0 %322
    %324 = vrot.lane.b32.xlu0 %v174, 126
    %v325 = vpop.permute.xlu0 %324
    %326 = vrot.lane.b32.xlu0 %v175, 126
    %v327 = vpop.permute.xlu0 %326
    %328 = vrot.lane.b32.xlu0 %v176, 126
    %v329 = vpop.permute.xlu0 %328
    %330 = vrot.lane.b32.xlu0 %v177, 126
    %v331 = vpop.permute.xlu0 %330
    %332 = vrot.lane.b32.xlu0 %v178, 126
    %v333 = vpop.permute.xlu0 %332
    %334 = vrot.lane.b32.xlu0 %v179, 126
    %v335 = vpop.permute.xlu0 %334
    %336 = vrot.lane.b32.xlu0 %v180, 126
    %v337 = vpop.permute.xlu0 %336
    %338 = vrot.lane.b32.xlu0 %v181, 126
    %v339 = vpop.permute.xlu0 %338
    %340 = vrot.lane.b32.xlu0 %v182, 126
    %v341 = vpop.permute.xlu0 %340
    %342 = vrot.lane.b32.xlu0 %v183, 126
    %v343 = vpop.permute.xlu0 %342
    %v360 = vmax.f32 %v296, %v313
    %v361 = vmax.f32 %v297, %v315
    %v362 = vmax.f32 %v298, %v317
    %v363 = vmax.f32 %v299, %v319
    %v364 = vmax.f32 %v300, %v321
    %v365 = vmax.f32 %v301, %v323
    %v366 = vmax.f32 %v302, %v325
    %v367 = vmax.f32 %v303, %v327
    %v368 = vmax.f32 %v304, %v329
    %v369 = vmax.f32 %v305, %v331
    %v370 = vmax.f32 %v306, %v333
    %v371 = vmax.f32 %v307, %v335
    %v372 = vmax.f32 %v308, %v337
    %v373 = vmax.f32 %v309, %v339
    %v374 = vmax.f32 %v310, %v341
    %v375 = vmax.f32 %v311, %v343
    %392 = vrot.lane.b32.xlu0 %v200, 127
    %v393 = vpop.permute.xlu0 %392
    %394 = vrot.lane.b32.xlu0 %v201, 127
    %v395 = vpop.permute.xlu0 %394
    %396 = vrot.lane.b32.xlu0 %v202, 127
    %v397 = vpop.permute.xlu0 %396
    %398 = vrot.lane.b32.xlu0 %v203, 127
    %v399 = vpop.permute.xlu0 %398
    %400 = vrot.lane.b32.xlu0 %v204, 127
    %v401 = vpop.permute.xlu0 %400
    %402 = vrot.lane.b32.xlu0 %v205, 127
    %v403 = vpop.permute.xlu0 %402
    %404 = vrot.lane.b32.xlu0 %v206, 127
    %v405 = vpop.permute.xlu0 %404
    %406 = vrot.lane.b32.xlu0 %v207, 127
    %v407 = vpop.permute.xlu0 %406
    %408 = vrot.lane.b32.xlu0 %v208, 127
    %v409 = vpop.permute.xlu0 %408
    %410 = vrot.lane.b32.xlu0 %v209, 127
    %v411 = vpop.permute.xlu0 %410
    %412 = vrot.lane.b32.xlu0 %v210, 127
    %v413 = vpop.permute.xlu0 %412
    %414 = vrot.lane.b32.xlu0 %v211, 127
    %v415 = vpop.permute.xlu0 %414
    %416 = vrot.lane.b32.xlu0 %v212, 127
    %v417 = vpop.permute.xlu0 %416
    %418 = vrot.lane.b32.xlu0 %v213, 127
    %v419 = vpop.permute.xlu0 %418
    %420 = vrot.lane.b32.xlu0 %v214, 127
    %v421 = vpop.permute.xlu0 %420
    %422 = vrot.lane.b32.xlu0 %v215, 127
    %v423 = vpop.permute.xlu0 %422
    %v440 = vmin.f32 %v200, %v393
    %v441 = vmin.f32 %v201, %v395
    %v442 = vmin.f32 %v202, %v397
    %v443 = vmin.f32 %v203, %v399
    %v444 = vmin.f32 %v204, %v401
    %v445 = vmin.f32 %v205, %v403
    %v446 = vmin.f32 %v206, %v405
    %v447 = vmin.f32 %v207, %v407
    %v448 = vmin.f32 %v208, %v409
    %v449 = vmin.f32 %v209, %v411
    %v450 = vmin.f32 %v210, %v413
    %v451 = vmin.f32 %v211, %v415
    %v452 = vmin.f32 %v212, %v417
    %v453 = vmin.f32 %v213, %v419
    %v454 = vmin.f32 %v214, %v421
    %v455 = vmin.f32 %v215, %v423
    %v456 = vmax.f32 %v200, %v393
    %v457 = vmax.f32 %v201, %v395
    %v458 = vmax.f32 %v202, %v397
    %v459 = vmax.f32 %v203, %v399
    %v460 = vmax.f32 %v204, %v401
    %v461 = vmax.f32 %v205, %v403
    %v462 = vmax.f32 %v206, %v405
    %v463 = vmax.f32 %v207, %v407
    %v464 = vmax.f32 %v208, %v409
    %v465 = vmax.f32 %v209, %v411
    %v466 = vmax.f32 %v210, %v413
    %v467 = vmax.f32 %v211, %v415
    %v468 = vmax.f32 %v212, %v417
    %v469 = vmax.f32 %v213, %v419
    %v470 = vmax.f32 %v214, %v421
    %v471 = vmax.f32 %v215, %v423
    %472 = vrot.lane.b32.xlu0 %v200, 126
    %v473 = vpop.permute.xlu0 %472
    %474 = vrot.lane.b32.xlu0 %v201, 126
    %v475 = vpop.permute.xlu0 %474
    %476 = vrot.lane.b32.xlu0 %v202, 126
    %v477 = vpop.permute.xlu0 %476
    %478 = vrot.lane.b32.xlu0 %v203, 126
    %v479 = vpop.permute.xlu0 %478
    %480 = vrot.lane.b32.xlu0 %v204, 126
    %v481 = vpop.permute.xlu0 %480
    %482 = vrot.lane.b32.xlu0 %v205, 126
    %v483 = vpop.permute.xlu0 %482
    %484 = vrot.lane.b32.xlu0 %v206, 126
    %v485 = vpop.permute.xlu0 %484
    %486 = vrot.lane.b32.xlu0 %v207, 126
    %v487 = vpop.permute.xlu0 %486
    %488 = vrot.lane.b32.xlu0 %v208, 126
    %v489 = vpop.permute.xlu0 %488
    %490 = vrot.lane.b32.xlu0 %v209, 126
    %v491 = vpop.permute.xlu0 %490
    %492 = vrot.lane.b32.xlu0 %v210, 126
    %v493 = vpop.permute.xlu0 %492
    %494 = vrot.lane.b32.xlu0 %v211, 126
    %v495 = vpop.permute.xlu0 %494
    %496 = vrot.lane.b32.xlu0 %v212, 126
    %v497 = vpop.permute.xlu0 %496
    %498 = vrot.lane.b32.xlu0 %v213, 126
    %v499 = vpop.permute.xlu0 %498
    %500 = vrot.lane.b32.xlu0 %v214, 126
    %v501 = vpop.permute.xlu0 %500
    %502 = vrot.lane.b32.xlu0 %v215, 126
    %v503 = vpop.permute.xlu0 %502
    %v520 = vmin.f32 %v456, %v473
    %v521 = vmin.f32 %v457, %v475
    %v522 = vmin.f32 %v458, %v477
    %v523 = vmin.f32 %v459, %v479
    %v524 = vmin.f32 %v460, %v481
    %v525 = vmin.f32 %v461, %v483
    %v526 = vmin.f32 %v462, %v485
    %v527 = vmin.f32 %v463, %v487
    %v528 = vmin.f32 %v464, %v489
    %v529 = vmin.f32 %v465, %v491
    %v530 = vmin.f32 %v466, %v493
    %v531 = vmin.f32 %v467, %v495
    %v532 = vmin.f32 %v468, %v497
    %v533 = vmin.f32 %v469, %v499
    %v534 = vmin.f32 %v470, %v501
    %v535 = vmin.f32 %v471, %v503
    %v536 = vmax.f32 %v440, %v520
    %v537 = vmax.f32 %v441, %v521
    %v538 = vmax.f32 %v442, %v522
    %v539 = vmax.f32 %v443, %v523
    %v540 = vmax.f32 %v444, %v524
    %v541 = vmax.f32 %v445, %v525
    %v542 = vmax.f32 %v446, %v526
    %v543 = vmax.f32 %v447, %v527
    %v544 = vmax.f32 %v448, %v528
    %v545 = vmax.f32 %v449, %v529
    %v546 = vmax.f32 %v450, %v530
    %v547 = vmax.f32 %v451, %v531
    %v548 = vmax.f32 %v452, %v532
    %v549 = vmax.f32 %v453, %v533
    %v550 = vmax.f32 %v454, %v534
    %v551 = vmax.f32 %v455, %v535
    %568 = vrot.lane.b32.xlu0 %v216, 127
    %v569 = vpop.permute.xlu0 %568
    %570 = vrot.lane.b32.xlu0 %v217, 127
    %v571 = vpop.permute.xlu0 %570
    %572 = vrot.lane.b32.xlu0 %v218, 127
    %v573 = vpop.permute.xlu0 %572
    %574 = vrot.lane.b32.xlu0 %v219, 127
    %v575 = vpop.permute.xlu0 %574
    %576 = vrot.lane.b32.xlu0 %v220, 127
    %v577 = vpop.permute.xlu0 %576
    %578 = vrot.lane.b32.xlu0 %v221, 127
    %v579 = vpop.permute.xlu0 %578
    %580 = vrot.lane.b32.xlu0 %v222, 127
    %v581 = vpop.permute.xlu0 %580
    %582 = vrot.lane.b32.xlu0 %v223, 127
    %v583 = vpop.permute.xlu0 %582
    %584 = vrot.lane.b32.xlu0 %v224, 127
    %v585 = vpop.permute.xlu0 %584
    %586 = vrot.lane.b32.xlu0 %v225, 127
    %v587 = vpop.permute.xlu0 %586
    %588 = vrot.lane.b32.xlu0 %v226, 127
    %v589 = vpop.permute.xlu0 %588
    %590 = vrot.lane.b32.xlu0 %v227, 127
    %v591 = vpop.permute.xlu0 %590
    %592 = vrot.lane.b32.xlu0 %v228, 127
    %v593 = vpop.permute.xlu0 %592
    %594 = vrot.lane.b32.xlu0 %v229, 127
    %v595 = vpop.permute.xlu0 %594
    %596 = vrot.lane.b32.xlu0 %v230, 127
    %v597 = vpop.permute.xlu0 %596
    %598 = vrot.lane.b32.xlu0 %v231, 127
    %v599 = vpop.permute.xlu0 %598
    %v616 = vmin.f32 %v216, %v569
    %v617 = vmin.f32 %v217, %v571
    %v618 = vmin.f32 %v218, %v573
    %v619 = vmin.f32 %v219, %v575
    %v620 = vmin.f32 %v220, %v577
    %v621 = vmin.f32 %v221, %v579
    %v622 = vmin.f32 %v222, %v581
    %v623 = vmin.f32 %v223, %v583
    %v624 = vmin.f32 %v224, %v585
    %v625 = vmin.f32 %v225, %v587
    %v626 = vmin.f32 %v226, %v589
    %v627 = vmin.f32 %v227, %v591
    %v628 = vmin.f32 %v228, %v593
    %v629 = vmin.f32 %v229, %v595
    %v630 = vmin.f32 %v230, %v597
    %v631 = vmin.f32 %v231, %v599
    %632 = vrot.lane.b32.xlu0 %v216, 126
    %v633 = vpop.permute.xlu0 %632
    %634 = vrot.lane.b32.xlu0 %v217, 126
    %v635 = vpop.permute.xlu0 %634
    %636 = vrot.lane.b32.xlu0 %v218, 126
    %v637 = vpop.permute.xlu0 %636
    %638 = vrot.lane.b32.xlu0 %v219, 126
    %v639 = vpop.permute.xlu0 %638
    %640 = vrot.lane.b32.xlu0 %v220, 126
    %v641 = vpop.permute.xlu0 %640
    %642 = vrot.lane.b32.xlu0 %v221, 126
    %v643 = vpop.permute.xlu0 %642
    %644 = vrot.lane.b32.xlu0 %v222, 126
    %v645 = vpop.permute.xlu0 %644
    %646 = vrot.lane.b32.xlu0 %v223, 126
    %v647 = vpop.permute.xlu0 %646
    %648 = vrot.lane.b32.xlu0 %v224, 126
    %v649 = vpop.permute.xlu0 %648
    %650 = vrot.lane.b32.xlu0 %v225, 126
    %v651 = vpop.permute.xlu0 %650
    %652 = vrot.lane.b32.xlu0 %v226, 126
    %v653 = vpop.permute.xlu0 %652
    %654 = vrot.lane.b32.xlu0 %v227, 126
    %v655 = vpop.permute.xlu0 %654
    %656 = vrot.lane.b32.xlu0 %v228, 126
    %v657 = vpop.permute.xlu0 %656
    %658 = vrot.lane.b32.xlu0 %v229, 126
    %v659 = vpop.permute.xlu0 %658
    %660 = vrot.lane.b32.xlu0 %v230, 126
    %v661 = vpop.permute.xlu0 %660
    %662 = vrot.lane.b32.xlu0 %v231, 126
    %v663 = vpop.permute.xlu0 %662
    %v680 = vmin.f32 %v616, %v633
    %v681 = vmin.f32 %v617, %v635
    %v682 = vmin.f32 %v618, %v637
    %v683 = vmin.f32 %v619, %v639
    %v684 = vmin.f32 %v620, %v641
    %v685 = vmin.f32 %v621, %v643
    %v686 = vmin.f32 %v622, %v645
    %v687 = vmin.f32 %v623, %v647
    %v688 = vmin.f32 %v624, %v649
    %v689 = vmin.f32 %v625, %v651
    %v690 = vmin.f32 %v626, %v653
    %v691 = vmin.f32 %v627, %v655
    %v692 = vmin.f32 %v628, %v657
    %v693 = vmin.f32 %v629, %v659
    %v694 = vmin.f32 %v630, %v661
    %v695 = vmin.f32 %v631, %v663
    %v696 = vmin.f32 %v360, %v536
    %v697 = vmin.f32 %v361, %v537
    %v698 = vmin.f32 %v362, %v538
    %v699 = vmin.f32 %v363, %v539
    %v700 = vmin.f32 %v364, %v540
    %v701 = vmin.f32 %v365, %v541
    %v702 = vmin.f32 %v366, %v542
    %v703 = vmin.f32 %v367, %v543
    %v704 = vmin.f32 %v368, %v544
    %v705 = vmin.f32 %v369, %v545
    %v706 = vmin.f32 %v370, %v546
    %v707 = vmin.f32 %v371, %v547
    %v708 = vmin.f32 %v372, %v548
    %v709 = vmin.f32 %v373, %v549
    %v710 = vmin.f32 %v374, %v550
    %v711 = vmin.f32 %v375, %v551
    %v712 = vmax.f32 %v360, %v536
    %v713 = vmax.f32 %v361, %v537
    %v714 = vmax.f32 %v362, %v538
    %v715 = vmax.f32 %v363, %v539
    %v716 = vmax.f32 %v364, %v540
    %v717 = vmax.f32 %v365, %v541
    %v718 = vmax.f32 %v366, %v542
    %v719 = vmax.f32 %v367, %v543
    %v720 = vmax.f32 %v368, %v544
    %v721 = vmax.f32 %v369, %v545
    %v722 = vmax.f32 %v370, %v546
    %v723 = vmax.f32 %v371, %v547
    %v724 = vmax.f32 %v372, %v548
    %v725 = vmax.f32 %v373, %v549
    %v726 = vmax.f32 %v374, %v550
    %v727 = vmax.f32 %v375, %v551
    %v728 = vmin.f32 %v712, %v680
    %v729 = vmin.f32 %v713, %v681
    %v730 = vmin.f32 %v714, %v682
    %v731 = vmin.f32 %v715, %v683
    %v732 = vmin.f32 %v716, %v684
    %v733 = vmin.f32 %v717, %v685
    %v734 = vmin.f32 %v718, %v686
    %v735 = vmin.f32 %v719, %v687
    %v736 = vmin.f32 %v720, %v688
    %v737 = vmin.f32 %v721, %v689
    %v738 = vmin.f32 %v722, %v690
    %v739 = vmin.f32 %v723, %v691
    %v740 = vmin.f32 %v724, %v692
    %v741 = vmin.f32 %v725, %v693
    %v742 = vmin.f32 %v726, %v694
    %v743 = vmin.f32 %v727, %v695
    %v744 = vmax.f32 %v696, %v728
    %v745 = vmax.f32 %v697, %v729
    %v746 = vmax.f32 %v698, %v730
    %v747 = vmax.f32 %v699, %v731
    %v748 = vmax.f32 %v700, %v732
    %v749 = vmax.f32 %v701, %v733
    %v750 = vmax.f32 %v702, %v734
    %v751 = vmax.f32 %v703, %v735
    %v752 = vmax.f32 %v704, %v736
    %v753 = vmax.f32 %v705, %v737
    %v754 = vmax.f32 %v706, %v738
    %v755 = vmax.f32 %v707, %v739
    %v756 = vmax.f32 %v708, %v740
    %v757 = vmax.f32 %v709, %v741
    %v758 = vmax.f32 %v710, %v742
    %v759 = vmax.f32 %v711, %v743
    %vm760 = vcmask 113664
    %761 = vst.msk [vmem:[%s1] sm:$0xff] %vm760, %v744
    %vm762 = vcmask 111616
    %763 = vst.msk [vmem:[%s1 + $0x8] sm:$0x3f] %vm762, %v745
    %764 = vst.msk [vmem:[%s1 + $0x10] sm:$0xff] %vm760, %v746
    %765 = vst.msk [vmem:[%s1 + $0x18] sm:$0x3f] %vm762, %v747
    %766 = vst.msk [vmem:[%s1 + $0x20] sm:$0xff] %vm760, %v748
    %767 = vst.msk [vmem:[%s1 + $0x28] sm:$0x3f] %vm762, %v749
    %768 = vst.msk [vmem:[%s1 + $0x30] sm:$0xff] %vm760, %v750
    %769 = vst.msk [vmem:[%s1 + $0x38] sm:$0x3f] %vm762, %v751
    %770 = vst.msk [vmem:[%s1 + $0x40] sm:$0xff] %vm760, %v752
    %771 = vst.msk [vmem:[%s1 + $0x48] sm:$0x3f] %vm762, %v753
    %772 = vst.msk [vmem:[%s1 + $0x50] sm:$0xff] %vm760, %v754
    %773 = vst.msk [vmem:[%s1 + $0x58] sm:$0x3f] %vm762, %v755
    %774 = vst.msk [vmem:[%s1 + $0x60] sm:$0xff] %vm760, %v756
    %775 = vst.msk [vmem:[%s1 + $0x68] sm:$0x3f] %vm762, %v757
    %776 = vst.msk [vmem:[%s1 + $0x70] sm:$0xff] %vm760, %v758
    %777 = vst.msk [vmem:[%s1 + $0x78] sm:$0x3f] %vm762, %v759
    // Predicated region
    $region10: #{tpu_custom_call.1} parent=1 // pred_check
      _
    $region11: #{tpu_custom_call.1} parent=1 // pred_check_branch
      %779 = sbr.rel (0) target = $region13
    $region12: #{tpu_custom_call.1} parent=1 // pred_region
      _
    $region13: #{tpu_custom_call.1} parent=1 // pred_fallthru
      _
    // Predicated region
    $region14: #{tpu_custom_call.1} parent=1 // pred_check
      _
    $region15: #{tpu_custom_call.1} parent=1 // pred_check_branch
      %781 = sbr.rel (0) target = $region17
    $region16: #{tpu_custom_call.1} parent=1 // pred_region
      _
    $region17: #{tpu_custom_call.1} parent=1 // pred_fallthru
      _
    %782 = vsyncpa [#allocation3], 1

</llo_original>
